<compile_context>
chip_gen: v7x
topology: tpu7x:2x2x1
jax: 0.10.0
libtpu: 0.0.40
codegen_flags: <defaults>
</compile_context>

<pallas_src>
import functools

import jax
import jax.numpy as jnp
from jax.experimental import pallas as pl
from jax.experimental.pallas import tpu as pltpu


def _round_up(x, m):
    return (x + m - 1) // m * m


def _rbm_kernel(k, v_ref, w_ref, wt_ref, vb_ref, hb_ref, uh_ref, uv_ref, vout_ref):
    # Resident parameters (bf16 weights for the MXU, f32 biases for the VPU/EUP math).
    w = w_ref[...]                      # (n_hin_p, n_vis_p)  bf16
    wt = wt_ref[...]                    # (n_vis_p, n_hin_p)  bf16
    vb = vb_ref[...]                    # (1, n_vis_p)        f32
    hb = hb_ref[...]                    # (1, n_hin_p)        f32

    def v_to_h(vv, u):
        # F.linear(v, W, h_bias) = v @ W.T + h_bias ; W.T is pre-transposed -> plain dot.
        pre = jnp.dot(vv.astype(jnp.bfloat16), wt,
                      preferred_element_type=jnp.float32) + hb
        p_h = jax.nn.sigmoid(pre)
        # relu(sign(p - U)) == 1.0 where p > U else 0.0
        return jnp.where(p_h > u, 1.0, 0.0)

    def h_to_v(hh, u):
        # F.linear(h, W.t(), v_bias) = h @ W + v_bias
        pre = jnp.dot(hh.astype(jnp.bfloat16), w,
                      preferred_element_type=jnp.float32) + vb
        p_v = jax.nn.sigmoid(pre)
        return jnp.where(p_v > u, 1.0, 0.0)

    v0 = v_ref[...].astype(jnp.float32)         # (TB, n_vis_p)

    h = v_to_h(v0, uh_ref[0])                   # initial hidden sample
    v_last = v0
    # k is a small static Python int -> unrolled Gibbs chain.  The trailing v_to_h of the
    # last iteration is dead (its result is never used) and therefore skipped.
    for i in range(k):
        v_last = h_to_v(h, uv_ref[i])
        if i + 1 < k:
            h = v_to_h(v_last, uh_ref[i + 1])

    vout_ref[...] = v_last


def rbm_forward(v, W, v_bias, h_bias, *, k=5, key=None, batch_tile=128):
    """Returns (v, v_) like RBM.forward.

    batch_tile: batch rows per grid step (128 is a good default; 256 on v6e/v7x fills
    the 2x256 MXU — both fit comfortably in the v7x 64 MiB VMEM for MNIST-sized RBMs).
    """
    assert k >= 1, "RBM.forward requires k >= 1"
    if key is None:
        key = jax.random.PRNGKey(0)

    B, n_vis = v.shape
    n_hin = W.shape[0]

    # Lane-pad feature dims to multiples of 128; pad batch to a multiple of the tile.
    n_vis_p = _round_up(n_vis, 128)
    n_hin_p = _round_up(n_hin, 128)
    tb = min(batch_tile, _round_up(B, 8))
    B_p = _round_up(B, tb)

    f32 = jnp.float32
    v_p = jnp.zeros((B_p, n_vis_p), f32).at[:B, :n_vis].set(v.astype(f32))
    W_p = jnp.zeros((n_hin_p, n_vis_p), f32).at[:n_hin, :n_vis].set(W.astype(f32))
    w_bf = W_p.astype(jnp.bfloat16)              # (n_hin_p, n_vis_p)
    wt_bf = W_p.T.astype(jnp.bfloat16)           # (n_vis_p, n_hin_p), transposed once here
    vb_p = jnp.zeros((1, n_vis_p), f32).at[0, :n_vis].set(v_bias.astype(f32))
    hb_p = jnp.zeros((1, n_hin_p), f32).at[0, :n_hin].set(h_bias.astype(f32))

    # Pre-drawn uniforms for every Bernoulli sample in the chain (k hidden + k visible
    # draws; the dropped trailing v_to_h needs none).  Tiled along batch with the grid.
    kh, kv = jax.random.split(key)
    u_h = jax.random.uniform(kh, (k, B_p, n_hin_p), dtype=f32)
    u_v = jax.random.uniform(kv, (k, B_p, n_vis_p), dtype=f32)

    grid = (B_p // tb,)
    kernel = functools.partial(_rbm_kernel, k)

    v_out_p = pl.pallas_call(
        kernel,
        out_shape=jax.ShapeDtypeStruct((B_p, n_vis_p), f32),
        grid_spec=pltpu.PrefetchScalarGridSpec(
            num_scalar_prefetch=0,
            grid=grid,
            in_specs=[
                pl.BlockSpec((tb, n_vis_p), lambda i: (i, 0)),        # v block (pipelined)
                pl.BlockSpec((n_hin_p, n_vis_p), lambda i: (0, 0)),   # W      (resident)
                pl.BlockSpec((n_vis_p, n_hin_p), lambda i: (0, 0)),   # W.T    (resident)
                pl.BlockSpec((1, n_vis_p), lambda i: (0, 0)),         # v_bias (resident)
                pl.BlockSpec((1, n_hin_p), lambda i: (0, 0)),         # h_bias (resident)
                pl.BlockSpec((k, tb, n_hin_p), lambda i: (0, i, 0)),  # hidden uniforms
                pl.BlockSpec((k, tb, n_vis_p), lambda i: (0, i, 0)),  # visible uniforms
            ],
            out_specs=pl.BlockSpec((tb, n_vis_p), lambda i: (i, 0)),
        ),
        compiler_params=pltpu.CompilerParams(
            dimension_semantics=("parallel",),
        ),
    )(v_p, w_bf, wt_bf, vb_p, hb_p, u_h, u_v)

    v_ = v_out_p[:B, :n_vis]
    return v, v_


if __name__ == "__main__":
    # Small shapes consistent with the module (n_vis=784, n_hin=500 scaled down);
    # deliberately non-multiples of 128 to exercise the lane-padding path.
    B, N_VIS, N_HIN, K = 8, 196, 100, 5

    key = jax.random.PRNGKey(0)
    k_w, k_v, k_u = jax.random.split(key, 3)

    # Deterministic parameter init mirroring the PyTorch __init__.
    W = jax.random.normal(k_w, (N_HIN, N_VIS), dtype=jnp.float32) * 0.01
    v_bias = jnp.zeros((N_VIS,), dtype=jnp.float32)
    h_bias = jnp.zeros((N_HIN,), dtype=jnp.float32)

    # Example visible input (binarized "pixels").
    v_in = (jax.random.uniform(k_v, (B, N_VIS), dtype=jnp.float32) > 0.5).astype(
        jnp.float32
    )

    v_out, v_sample = rbm_forward(v_in, W, v_bias, h_bias, k=K, key=k_u)
    jax.block_until_ready((v_out, v_sample))

    assert v_out.shape == (B, N_VIS)
    assert v_sample.shape == (B, N_VIS)
    # forward() returns the input unchanged as the first element.
    assert bool(jnp.all(v_out == v_in))
    # Samples are exactly {0,1} by construction of relu(sign(p - U)).
    assert bool(jnp.all((v_sample == 0.0) | (v_sample == 1.0)))

    print("KERNEL_OK")
</pallas_src>

<mosaic_0001>
module attributes {stable_mosaic.version = 11 : i64} {
  func.func @_rbm_kernel(%arg0: i32, %arg1: memref<8x256xf32, #tpu.memory_space<vmem>>, %arg2: memref<128x256xbf16, #tpu.memory_space<vmem>>, %arg3: memref<256x128xbf16, #tpu.memory_space<vmem>>, %arg4: memref<1x256xf32, #tpu.memory_space<vmem>>, %arg5: memref<1x128xf32, #tpu.memory_space<vmem>>, %arg6: memref<5x8x128xf32, #tpu.memory_space<vmem>>, %arg7: memref<5x8x256xf32, #tpu.memory_space<vmem>>, %arg8: memref<8x256xf32, #tpu.memory_space<vmem>>) attributes {dimension_semantics = [#tpu.dimension_semantics<parallel>], iteration_bounds = array<i64: 1>, scalar_prefetch = 0 : i64, scratch_operands = 0 : i64, tpu.core_type = #tpu.core_type<tc>, window_params = [{transform_indices = @transform_0, window_bounds = array<i64: 8, 256>}, {pipeline_mode = #tpu.pipeline_mode<synchronous>, transform_indices = @transform_1, window_bounds = array<i64: 128, 256>}, {pipeline_mode = #tpu.pipeline_mode<synchronous>, transform_indices = @transform_2, window_bounds = array<i64: 256, 128>}, {pipeline_mode = #tpu.pipeline_mode<synchronous>, transform_indices = @transform_3, window_bounds = array<i64: 1, 256>}, {pipeline_mode = #tpu.pipeline_mode<synchronous>, transform_indices = @transform_4, window_bounds = array<i64: 1, 128>}, {transform_indices = @transform_5, window_bounds = array<i64: 5, 8, 128>}, {transform_indices = @transform_6, window_bounds = array<i64: 5, 8, 256>}, {transform_indices = @transform_7, window_bounds = array<i64: 8, 256>}]} {
    %c0 = arith.constant 0 : index
    %c0_0 = arith.constant 0 : index
    %0 = vector.load %arg2[%c0, %c0_0] : memref<128x256xbf16, #tpu.memory_space<vmem>>, vector<128x256xbf16>
    %c0_1 = arith.constant 0 : index
    %c0_2 = arith.constant 0 : index
    %1 = vector.load %arg3[%c0_1, %c0_2] : memref<256x128xbf16, #tpu.memory_space<vmem>>, vector<256x128xbf16>
    %c0_3 = arith.constant 0 : index
    %c0_4 = arith.constant 0 : index
    %2 = vector.load %arg4[%c0_3, %c0_4] : memref<1x256xf32, #tpu.memory_space<vmem>>, vector<1x256xf32>
    %c0_5 = arith.constant 0 : index
    %c0_6 = arith.constant 0 : index
    %3 = vector.load %arg5[%c0_5, %c0_6] : memref<1x128xf32, #tpu.memory_space<vmem>>, vector<1x128xf32>
    %c0_7 = arith.constant 0 : index
    %c0_8 = arith.constant 0 : index
    %4 = vector.load %arg1[%c0_7, %c0_8] : memref<8x256xf32, #tpu.memory_space<vmem>>, vector<8x256xf32>
    %c0_9 = arith.constant 0 : index
    %c0_10 = arith.constant 0 : index
    %c0_11 = arith.constant 0 : index
    %5 = vector.load %arg6[%c0_9, %c0_10, %c0_11] : memref<5x8x128xf32, #tpu.memory_space<vmem>>, vector<1x8x128xf32>
    %6 = vector.shape_cast %5 : vector<1x8x128xf32> to vector<8x128xf32>
    %7 = arith.truncf %4 : vector<8x256xf32> to vector<8x256xbf16>
    %cst = arith.constant dense<0.000000e+00> : vector<8x128xf32>
    %8 = tpu.matmul %7, %1, %cst {dimension_numbers = #tpu.dot_dimension_numbers<[1], [0], [0], [1], [0, 0, 1, 1], [], []>} : vector<8x256xbf16>, vector<256x128xbf16>, vector<8x128xf32> -> vector<8x128xf32>
    %9 = vector.broadcast %3 : vector<1x128xf32> to vector<8x128xf32>
    %10 = arith.addf %8, %9 : vector<8x128xf32>
    %11 = arith.negf %10 : vector<8x128xf32>
    %12 = math.exp %11 : vector<8x128xf32>
    %cst_12 = arith.constant 1.000000e+00 : f32
    %13 = vector.broadcast %cst_12 : f32 to vector<8x128xf32>
    %14 = arith.addf %13, %12 : vector<8x128xf32>
    %15 = arith.divf %13, %14 : vector<8x128xf32>
    %16 = arith.cmpf ogt, %15, %6 : vector<8x128xf32>
    %cst_13 = arith.constant 1.000000e+00 : f32
    %cst_14 = arith.constant 0.000000e+00 : f32
    %17 = vector.broadcast %cst_13 : f32 to vector<8x128xf32>
    %18 = vector.broadcast %cst_14 : f32 to vector<8x128xf32>
    %19 = arith.select %16, %17, %18 : vector<8x128xi1>, vector<8x128xf32>
    %c0_15 = arith.constant 0 : index
    %c0_16 = arith.constant 0 : index
    %c0_17 = arith.constant 0 : index
    %20 = vector.load %arg7[%c0_15, %c0_16, %c0_17] : memref<5x8x256xf32, #tpu.memory_space<vmem>>, vector<1x8x256xf32>
    %21 = vector.shape_cast %20 : vector<1x8x256xf32> to vector<8x256xf32>
    %22 = arith.truncf %19 : vector<8x128xf32> to vector<8x128xbf16>
    %cst_18 = arith.constant dense<0.000000e+00> : vector<8x256xf32>
    %23 = tpu.matmul %22, %0, %cst_18 {dimension_numbers = #tpu.dot_dimension_numbers<[1], [0], [0], [1], [0, 0, 1, 1], [], []>} : vector<8x128xbf16>, vector<128x256xbf16>, vector<8x256xf32> -> vector<8x256xf32>
    %24 = vector.broadcast %2 : vector<1x256xf32> to vector<8x256xf32>
    %25 = arith.addf %23, %24 : vector<8x256xf32>
    %26 = arith.negf %25 : vector<8x256xf32>
    %27 = math.exp %26 : vector<8x256xf32>
    %cst_19 = arith.constant 1.000000e+00 : f32
    %28 = vector.broadcast %cst_19 : f32 to vector<8x256xf32>
    %29 = arith.addf %28, %27 : vector<8x256xf32>
    %30 = arith.divf %28, %29 : vector<8x256xf32>
    %31 = arith.cmpf ogt, %30, %21 : vector<8x256xf32>
    %cst_20 = arith.constant 1.000000e+00 : f32
    %cst_21 = arith.constant 0.000000e+00 : f32
    %32 = vector.broadcast %cst_20 : f32 to vector<8x256xf32>
    %33 = vector.broadcast %cst_21 : f32 to vector<8x256xf32>
    %34 = arith.select %31, %32, %33 : vector<8x256xi1>, vector<8x256xf32>
    %c1 = arith.constant 1 : index
    %c0_22 = arith.constant 0 : index
    %c0_23 = arith.constant 0 : index
    %35 = vector.load %arg6[%c1, %c0_22, %c0_23] : memref<5x8x128xf32, #tpu.memory_space<vmem>>, vector<1x8x128xf32>
    %36 = vector.shape_cast %35 : vector<1x8x128xf32> to vector<8x128xf32>
    %37 = arith.truncf %34 : vector<8x256xf32> to vector<8x256xbf16>
    %cst_24 = arith.constant dense<0.000000e+00> : vector<8x128xf32>
    %38 = tpu.matmul %37, %1, %cst_24 {dimension_numbers = #tpu.dot_dimension_numbers<[1], [0], [0], [1], [0, 0, 1, 1], [], []>} : vector<8x256xbf16>, vector<256x128xbf16>, vector<8x128xf32> -> vector<8x128xf32>
    %39 = vector.broadcast %3 : vector<1x128xf32> to vector<8x128xf32>
    %40 = arith.addf %38, %39 : vector<8x128xf32>
    %41 = arith.negf %40 : vector<8x128xf32>
    %42 = math.exp %41 : vector<8x128xf32>
    %cst_25 = arith.constant 1.000000e+00 : f32
    %43 = vector.broadcast %cst_25 : f32 to vector<8x128xf32>
    %44 = arith.addf %43, %42 : vector<8x128xf32>
    %45 = arith.divf %43, %44 : vector<8x128xf32>
    %46 = arith.cmpf ogt, %45, %36 : vector<8x128xf32>
    %cst_26 = arith.constant 1.000000e+00 : f32
    %cst_27 = arith.constant 0.000000e+00 : f32
    %47 = vector.broadcast %cst_26 : f32 to vector<8x128xf32>
    %48 = vector.broadcast %cst_27 : f32 to vector<8x128xf32>
    %49 = arith.select %46, %47, %48 : vector<8x128xi1>, vector<8x128xf32>
    %c1_28 = arith.constant 1 : index
    %c0_29 = arith.constant 0 : index
    %c0_30 = arith.constant 0 : index
    %50 = vector.load %arg7[%c1_28, %c0_29, %c0_30] : memref<5x8x256xf32, #tpu.memory_space<vmem>>, vector<1x8x256xf32>
    %51 = vector.shape_cast %50 : vector<1x8x256xf32> to vector<8x256xf32>
    %52 = arith.truncf %49 : vector<8x128xf32> to vector<8x128xbf16>
    %cst_31 = arith.constant dense<0.000000e+00> : vector<8x256xf32>
    %53 = tpu.matmul %52, %0, %cst_31 {dimension_numbers = #tpu.dot_dimension_numbers<[1], [0], [0], [1], [0, 0, 1, 1], [], []>} : vector<8x128xbf16>, vector<128x256xbf16>, vector<8x256xf32> -> vector<8x256xf32>
    %54 = vector.broadcast %2 : vector<1x256xf32> to vector<8x256xf32>
    %55 = arith.addf %53, %54 : vector<8x256xf32>
    %56 = arith.negf %55 : vector<8x256xf32>
    %57 = math.exp %56 : vector<8x256xf32>
    %cst_32 = arith.constant 1.000000e+00 : f32
    %58 = vector.broadcast %cst_32 : f32 to vector<8x256xf32>
    %59 = arith.addf %58, %57 : vector<8x256xf32>
    %60 = arith.divf %58, %59 : vector<8x256xf32>
    %61 = arith.cmpf ogt, %60, %51 : vector<8x256xf32>
    %cst_33 = arith.constant 1.000000e+00 : f32
    %cst_34 = arith.constant 0.000000e+00 : f32
    %62 = vector.broadcast %cst_33 : f32 to vector<8x256xf32>
    %63 = vector.broadcast %cst_34 : f32 to vector<8x256xf32>
    %64 = arith.select %61, %62, %63 : vector<8x256xi1>, vector<8x256xf32>
    %c2 = arith.constant 2 : index
    %c0_35 = arith.constant 0 : index
    %c0_36 = arith.constant 0 : index
    %65 = vector.load %arg6[%c2, %c0_35, %c0_36] : memref<5x8x128xf32, #tpu.memory_space<vmem>>, vector<1x8x128xf32>
    %66 = vector.shape_cast %65 : vector<1x8x128xf32> to vector<8x128xf32>
    %67 = arith.truncf %64 : vector<8x256xf32> to vector<8x256xbf16>
    %cst_37 = arith.constant dense<0.000000e+00> : vector<8x128xf32>
    %68 = tpu.matmul %67, %1, %cst_37 {dimension_numbers = #tpu.dot_dimension_numbers<[1], [0], [0], [1], [0, 0, 1, 1], [], []>} : vector<8x256xbf16>, vector<256x128xbf16>, vector<8x128xf32> -> vector<8x128xf32>
    %69 = vector.broadcast %3 : vector<1x128xf32> to vector<8x128xf32>
    %70 = arith.addf %68, %69 : vector<8x128xf32>
    %71 = arith.negf %70 : vector<8x128xf32>
    %72 = math.exp %71 : vector<8x128xf32>
    %cst_38 = arith.constant 1.000000e+00 : f32
    %73 = vector.broadcast %cst_38 : f32 to vector<8x128xf32>
    %74 = arith.addf %73, %72 : vector<8x128xf32>
    %75 = arith.divf %73, %74 : vector<8x128xf32>
    %76 = arith.cmpf ogt, %75, %66 : vector<8x128xf32>
    %cst_39 = arith.constant 1.000000e+00 : f32
    %cst_40 = arith.constant 0.000000e+00 : f32
    %77 = vector.broadcast %cst_39 : f32 to vector<8x128xf32>
    %78 = vector.broadcast %cst_40 : f32 to vector<8x128xf32>
    %79 = arith.select %76, %77, %78 : vector<8x128xi1>, vector<8x128xf32>
    %c2_41 = arith.constant 2 : index
    %c0_42 = arith.constant 0 : index
    %c0_43 = arith.constant 0 : index
    %80 = vector.load %arg7[%c2_41, %c0_42, %c0_43] : memref<5x8x256xf32, #tpu.memory_space<vmem>>, vector<1x8x256xf32>
    %81 = vector.shape_cast %80 : vector<1x8x256xf32> to vector<8x256xf32>
    %82 = arith.truncf %79 : vector<8x128xf32> to vector<8x128xbf16>
    %cst_44 = arith.constant dense<0.000000e+00> : vector<8x256xf32>
    %83 = tpu.matmul %82, %0, %cst_44 {dimension_numbers = #tpu.dot_dimension_numbers<[1], [0], [0], [1], [0, 0, 1, 1], [], []>} : vector<8x128xbf16>, vector<128x256xbf16>, vector<8x256xf32> -> vector<8x256xf32>
    %84 = vector.broadcast %2 : vector<1x256xf32> to vector<8x256xf32>
    %85 = arith.addf %83, %84 : vector<8x256xf32>
    %86 = arith.negf %85 : vector<8x256xf32>
    %87 = math.exp %86 : vector<8x256xf32>
    %cst_45 = arith.constant 1.000000e+00 : f32
    %88 = vector.broadcast %cst_45 : f32 to vector<8x256xf32>
    %89 = arith.addf %88, %87 : vector<8x256xf32>
    %90 = arith.divf %88, %89 : vector<8x256xf32>
    %91 = arith.cmpf ogt, %90, %81 : vector<8x256xf32>
    %cst_46 = arith.constant 1.000000e+00 : f32
    %cst_47 = arith.constant 0.000000e+00 : f32
    %92 = vector.broadcast %cst_46 : f32 to vector<8x256xf32>
    %93 = vector.broadcast %cst_47 : f32 to vector<8x256xf32>
    %94 = arith.select %91, %92, %93 : vector<8x256xi1>, vector<8x256xf32>
    %c3 = arith.constant 3 : index
    %c0_48 = arith.constant 0 : index
    %c0_49 = arith.constant 0 : index
    %95 = vector.load %arg6[%c3, %c0_48, %c0_49] : memref<5x8x128xf32, #tpu.memory_space<vmem>>, vector<1x8x128xf32>
    %96 = vector.shape_cast %95 : vector<1x8x128xf32> to vector<8x128xf32>
    %97 = arith.truncf %94 : vector<8x256xf32> to vector<8x256xbf16>
    %cst_50 = arith.constant dense<0.000000e+00> : vector<8x128xf32>
    %98 = tpu.matmul %97, %1, %cst_50 {dimension_numbers = #tpu.dot_dimension_numbers<[1], [0], [0], [1], [0, 0, 1, 1], [], []>} : vector<8x256xbf16>, vector<256x128xbf16>, vector<8x128xf32> -> vector<8x128xf32>
    %99 = vector.broadcast %3 : vector<1x128xf32> to vector<8x128xf32>
    %100 = arith.addf %98, %99 : vector<8x128xf32>
    %101 = arith.negf %100 : vector<8x128xf32>
    %102 = math.exp %101 : vector<8x128xf32>
    %cst_51 = arith.constant 1.000000e+00 : f32
    %103 = vector.broadcast %cst_51 : f32 to vector<8x128xf32>
    %104 = arith.addf %103, %102 : vector<8x128xf32>
    %105 = arith.divf %103, %104 : vector<8x128xf32>
    %106 = arith.cmpf ogt, %105, %96 : vector<8x128xf32>
    %cst_52 = arith.constant 1.000000e+00 : f32
    %cst_53 = arith.constant 0.000000e+00 : f32
    %107 = vector.broadcast %cst_52 : f32 to vector<8x128xf32>
    %108 = vector.broadcast %cst_53 : f32 to vector<8x128xf32>
    %109 = arith.select %106, %107, %108 : vector<8x128xi1>, vector<8x128xf32>
    %c3_54 = arith.constant 3 : index
    %c0_55 = arith.constant 0 : index
    %c0_56 = arith.constant 0 : index
    %110 = vector.load %arg7[%c3_54, %c0_55, %c0_56] : memref<5x8x256xf32, #tpu.memory_space<vmem>>, vector<1x8x256xf32>
    %111 = vector.shape_cast %110 : vector<1x8x256xf32> to vector<8x256xf32>
    %112 = arith.truncf %109 : vector<8x128xf32> to vector<8x128xbf16>
    %cst_57 = arith.constant dense<0.000000e+00> : vector<8x256xf32>
    %113 = tpu.matmul %112, %0, %cst_57 {dimension_numbers = #tpu.dot_dimension_numbers<[1], [0], [0], [1], [0, 0, 1, 1], [], []>} : vector<8x128xbf16>, vector<128x256xbf16>, vector<8x256xf32> -> vector<8x256xf32>
    %114 = vector.broadcast %2 : vector<1x256xf32> to vector<8x256xf32>
    %115 = arith.addf %113, %114 : vector<8x256xf32>
    %116 = arith.negf %115 : vector<8x256xf32>
    %117 = math.exp %116 : vector<8x256xf32>
    %cst_58 = arith.constant 1.000000e+00 : f32
    %118 = vector.broadcast %cst_58 : f32 to vector<8x256xf32>
    %119 = arith.addf %118, %117 : vector<8x256xf32>
    %120 = arith.divf %118, %119 : vector<8x256xf32>
    %121 = arith.cmpf ogt, %120, %111 : vector<8x256xf32>
    %cst_59 = arith.constant 1.000000e+00 : f32
    %cst_60 = arith.constant 0.000000e+00 : f32
    %122 = vector.broadcast %cst_59 : f32 to vector<8x256xf32>
    %123 = vector.broadcast %cst_60 : f32 to vector<8x256xf32>
    %124 = arith.select %121, %122, %123 : vector<8x256xi1>, vector<8x256xf32>
    %c4 = arith.constant 4 : index
    %c0_61 = arith.constant 0 : index
    %c0_62 = arith.constant 0 : index
    %125 = vector.load %arg6[%c4, %c0_61, %c0_62] : memref<5x8x128xf32, #tpu.memory_space<vmem>>, vector<1x8x128xf32>
    %126 = vector.shape_cast %125 : vector<1x8x128xf32> to vector<8x128xf32>
    %127 = arith.truncf %124 : vector<8x256xf32> to vector<8x256xbf16>
    %cst_63 = arith.constant dense<0.000000e+00> : vector<8x128xf32>
    %128 = tpu.matmul %127, %1, %cst_63 {dimension_numbers = #tpu.dot_dimension_numbers<[1], [0], [0], [1], [0, 0, 1, 1], [], []>} : vector<8x256xbf16>, vector<256x128xbf16>, vector<8x128xf32> -> vector<8x128xf32>
    %129 = vector.broadcast %3 : vector<1x128xf32> to vector<8x128xf32>
    %130 = arith.addf %128, %129 : vector<8x128xf32>
    %131 = arith.negf %130 : vector<8x128xf32>
    %132 = math.exp %131 : vector<8x128xf32>
    %cst_64 = arith.constant 1.000000e+00 : f32
    %133 = vector.broadcast %cst_64 : f32 to vector<8x128xf32>
    %134 = arith.addf %133, %132 : vector<8x128xf32>
    %135 = arith.divf %133, %134 : vector<8x128xf32>
    %136 = arith.cmpf ogt, %135, %126 : vector<8x128xf32>
    %cst_65 = arith.constant 1.000000e+00 : f32
    %cst_66 = arith.constant 0.000000e+00 : f32
    %137 = vector.broadcast %cst_65 : f32 to vector<8x128xf32>
    %138 = vector.broadcast %cst_66 : f32 to vector<8x128xf32>
    %139 = arith.select %136, %137, %138 : vector<8x128xi1>, vector<8x128xf32>
    %c4_67 = arith.constant 4 : index
    %c0_68 = arith.constant 0 : index
    %c0_69 = arith.constant 0 : index
    %140 = vector.load %arg7[%c4_67, %c0_68, %c0_69] : memref<5x8x256xf32, #tpu.memory_space<vmem>>, vector<1x8x256xf32>
    %141 = vector.shape_cast %140 : vector<1x8x256xf32> to vector<8x256xf32>
    %142 = arith.truncf %139 : vector<8x128xf32> to vector<8x128xbf16>
    %cst_70 = arith.constant dense<0.000000e+00> : vector<8x256xf32>
    %143 = tpu.matmul %142, %0, %cst_70 {dimension_numbers = #tpu.dot_dimension_numbers<[1], [0], [0], [1], [0, 0, 1, 1], [], []>} : vector<8x128xbf16>, vector<128x256xbf16>, vector<8x256xf32> -> vector<8x256xf32>
    %144 = vector.broadcast %2 : vector<1x256xf32> to vector<8x256xf32>
    %145 = arith.addf %143, %144 : vector<8x256xf32>
    %146 = arith.negf %145 : vector<8x256xf32>
    %147 = math.exp %146 : vector<8x256xf32>
    %cst_71 = arith.constant 1.000000e+00 : f32
    %148 = vector.broadcast %cst_71 : f32 to vector<8x256xf32>
    %149 = arith.addf %148, %147 : vector<8x256xf32>
    %150 = arith.divf %148, %149 : vector<8x256xf32>
    %151 = arith.cmpf ogt, %150, %141 : vector<8x256xf32>
    %cst_72 = arith.constant 1.000000e+00 : f32
    %cst_73 = arith.constant 0.000000e+00 : f32
    %152 = vector.broadcast %cst_72 : f32 to vector<8x256xf32>
    %153 = vector.broadcast %cst_73 : f32 to vector<8x256xf32>
    %154 = arith.select %151, %152, %153 : vector<8x256xi1>, vector<8x256xf32>
    %c0_74 = arith.constant 0 : index
    %c0_75 = arith.constant 0 : index
    %155 = vector.load %arg8[%c0_74, %c0_75] : memref<8x256xf32, #tpu.memory_space<vmem>>, vector<8x256xf32>
    tpu.vector_store %arg8[%c0_74, %c0_75], %154 {strides = array<i32>} : memref<8x256xf32, #tpu.memory_space<vmem>>, vector<8x256xf32>,
    return
  }
  func.func @transform_0(%arg0: i32) -> (i32, i32) {
    %c0_i32 = arith.constant 0 : i32
    %c0_i32_0 = arith.constant 0 : i32
    return %arg0, %c0_i32 : i32, i32
  }
  func.func @transform_1(%arg0: i32) -> (i32, i32) {
    %c0_i32 = arith.constant 0 : i32
    %c0_i32_0 = arith.constant 0 : i32
    %c0_i32_1 = arith.constant 0 : i32
    return %c0_i32, %c0_i32_0 : i32, i32
  }
  func.func @transform_2(%arg0: i32) -> (i32, i32) {
    %c0_i32 = arith.constant 0 : i32
    %c0_i32_0 = arith.constant 0 : i32
    %c0_i32_1 = arith.constant 0 : i32
    return %c0_i32, %c0_i32_0 : i32, i32
  }
  func.func @transform_3(%arg0: i32) -> (i32, i32) {
    %c0_i32 = arith.constant 0 : i32
    %c0_i32_0 = arith.constant 0 : i32
    %c0_i32_1 = arith.constant 0 : i32
    return %c0_i32, %c0_i32_0 : i32, i32
  }
  func.func @transform_4(%arg0: i32) -> (i32, i32) {
    %c0_i32 = arith.constant 0 : i32
    %c0_i32_0 = arith.constant 0 : i32
    %c0_i32_1 = arith.constant 0 : i32
    return %c0_i32, %c0_i32_0 : i32, i32
  }
  func.func @transform_5(%arg0: i32) -> (i32, i32, i32) {
    %c0_i32 = arith.constant 0 : i32
    %c0_i32_0 = arith.constant 0 : i32
    %c0_i32_1 = arith.constant 0 : i32
    return %c0_i32, %arg0, %c0_i32_0 : i32, i32, i32
  }
  func.func @transform_6(%arg0: i32) -> (i32, i32, i32) {
    %c0_i32 = arith.constant 0 : i32
    %c0_i32_0 = arith.constant 0 : i32
    %c0_i32_1 = arith.constant 0 : i32
    return %c0_i32, %arg0, %c0_i32_0 : i32, i32, i32
  }
  func.func @transform_7(%arg0: i32) -> (i32, i32) {
    %c0_i32 = arith.constant 0 : i32
    %c0_i32_0 = arith.constant 0 : i32
    return %arg0, %c0_i32 : i32, i32
  }
}

</mosaic_0001>

<llo_original>
// kernel: tpu_custom_call.1
$region0: #{tpu_custom_call.1}
  #allocation0 [shape = 'u32[]', space=smem, size = 0x4, offset = 0x4, fixed_abs, tag = 'smem constant byte address 0x4 - core index']
  #allocation1 [shape = 'u32[144,128]{1,0:T(1,128)}', space=vmem, size = 0x12000, scoped, tag = 'internal scratch']
  %s0 = inlined_call_operand.hbm [shape: f32[8,256], index: 0, kind: input, shape index: {}]
  %s1 = inlined_call_operand.hbm [shape: bf16[128,256], index: 1, kind: input, shape index: {}]
  %s2 = inlined_call_operand.hbm [shape: bf16[256,128], index: 2, kind: input, shape index: {}]
  %s3 = inlined_call_operand.vmem [shape: f32[1,256], index: 3, kind: input, shape index: {}]
  %s4 = inlined_call_operand.vmem [shape: f32[1,128], index: 4, kind: input, shape index: {}]
  %s5 = inlined_call_operand.hbm [shape: f32[5,8,128], index: 5, kind: input, shape index: {}]
  %s6 = inlined_call_operand.hbm [shape: f32[5,8,256], index: 6, kind: input, shape index: {}]
  %s7 = inlined_call_operand.hbm [shape: f32[8,256], index: 7, kind: output, shape index: {}]
  %s8 = sld [smem:[#allocation0]]
  $region58: #{tpu_custom_call.1} parent=0
    _
  %s10 = ssub.s32 1, %s8
  %s11 = scalar_select 0, %s10, %s8
  $region1: #{tpu_custom_call.1} parent=0
    #allocation2 [shape = 'u8[8192]{0}', space=vmem, size = 0x2000, scoped, tag = 'input window, operand 0, single buffered']
    #allocation3 [shape = 's32[1]{0}', space=sflag, size = 0x4, scoped, tag = 'scoped memory for tpu_custom_call.1']
    #allocation4 [shape = 's32[1]{0}', space=sflag, size = 0x4, scoped, tag = 'scoped memory for tpu_custom_call.1']
    #allocation5 [shape = 'u8[65536]{0}', space=vmem, size = 0x10000, scoped, tag = 'input window, operand 1, single buffered']
    #allocation6 [shape = 's32[1]{0}', space=sflag, size = 0x4, scoped, tag = 'scoped memory for tpu_custom_call.1']
    #allocation7 [shape = 'u8[65536]{0}', space=vmem, size = 0x10000, scoped, tag = 'input window, operand 2, single buffered']
    #allocation8 [shape = 'u8[20480]{0}', space=vmem, size = 0x5000, scoped, tag = 'input window, operand 5, single buffered']
    #allocation9 [shape = 's32[1]{0}', space=sflag, size = 0x4, scoped, tag = 'scoped memory for tpu_custom_call.1']
    #allocation10 [shape = 'u8[40960]{0}', space=vmem, size = 0xa000, scoped, tag = 'input window, operand 6, single buffered']
    #allocation11 [shape = 'u8[8192]{0}', space=vmem, size = 0x2000, scoped, tag = 'output window, operand 0, single buffered']
    %12 = vsyncpa [#allocation3], 0
    %13 = vsyncpa [#allocation6], 0
    %14 = vsyncpa [#allocation9], 0
    %15 = vsyncpa [#allocation4], 0
    // Predicated region
    $region2: #{tpu_custom_call.1} parent=1 // pred_check
      _
    $region3: #{tpu_custom_call.1} parent=1 // pred_check_branch
      %17 = sbr.rel (0) target = $region5
    $region4: #{tpu_custom_call.1} parent=1 // pred_region
      %s19 = ssub.s32 256, 256
      %20 = vsyncadd [#allocation3], %s19
      %s22 = sshll.u32 [#allocation2], 4
      %s23 = int_to_ptr.vmem [resolvable:$true] %s22
      %25 = dma.hbm_to_vmem [thread:$0]  %s0, 256, %s23, [#allocation3]
    $region5: #{tpu_custom_call.1} parent=1 // pred_fallthru
      _
    // Predicated region
    $region6: #{tpu_custom_call.1} parent=1 // pred_check
      _
    $region7: #{tpu_custom_call.1} parent=1 // pred_check_branch
      %27 = sbr.rel (0) target = $region9
    $region8: #{tpu_custom_call.1} parent=1 // pred_region
      %s29 = ssub.s32 2048, 2048
      %30 = vsyncadd [#allocation6], %s29
      %s31 = sshll.u32 [#allocation5], 4
      %s32 = int_to_ptr.vmem [resolvable:$true] %s31
      %37 = dma.hbm_to_vmem [thread:$0]  %s1, 2048, %s32, [#allocation6], 128, 128, 8
    $region9: #{tpu_custom_call.1} parent=1 // pred_fallthru
      _
    // Predicated region
    $region10: #{tpu_custom_call.1} parent=1 // pred_check
      _
    $region11: #{tpu_custom_call.1} parent=1 // pred_check_branch
      %39 = sbr.rel (0) target = $region13
    $region12: #{tpu_custom_call.1} parent=1 // pred_region
      %s41 = ssub.s32 2048, 2048
      %42 = vsyncadd [#allocation6], %s41
      %s43 = sshll.u32 [#allocation7], 4
      %s44 = int_to_ptr.vmem [resolvable:$true] %s43
      %49 = dma.hbm_to_vmem [thread:$0]  %s2, 2048, %s44, [#allocation6], 64, 64, 4
    $region13: #{tpu_custom_call.1} parent=1 // pred_fallthru
      _
    // Predicated region
    $region14: #{tpu_custom_call.1} parent=1 // pred_check
      _
    $region15: #{tpu_custom_call.1} parent=1 // pred_check_branch
      %51 = sbr.rel (0) target = $region17
    $region16: #{tpu_custom_call.1} parent=1 // pred_region
      _
    $region17: #{tpu_custom_call.1} parent=1 // pred_fallthru
      _
    // Predicated region
    $region18: #{tpu_custom_call.1} parent=1 // pred_check
      _
    $region19: #{tpu_custom_call.1} parent=1 // pred_check_branch
      %53 = sbr.rel (0) target = $region21
    $region20: #{tpu_custom_call.1} parent=1 // pred_region
      _
    $region21: #{tpu_custom_call.1} parent=1 // pred_fallthru
      _
    // Predicated region
    $region22: #{tpu_custom_call.1} parent=1 // pred_check
      _
    $region23: #{tpu_custom_call.1} parent=1 // pred_check_branch
      %55 = sbr.rel (0) target = $region25
    $region24: #{tpu_custom_call.1} parent=1 // pred_region
      %s57 = ssub.s32 640, 640
      %58 = vsyncadd [#allocation9], %s57
      %s59 = sshll.u32 [#allocation8], 4
      %s60 = int_to_ptr.vmem [resolvable:$true] %s59
      %65 = dma.hbm_to_vmem [thread:$0]  %s5, 640, %s60, [#allocation9], 128, 128, 8
    $region25: #{tpu_custom_call.1} parent=1 // pred_fallthru
      _
    // Predicated region
    $region26: #{tpu_custom_call.1} parent=1 // pred_check
      _
    $region27: #{tpu_custom_call.1} parent=1 // pred_check_branch
      %67 = sbr.rel (0) target = $region29
    $region28: #{tpu_custom_call.1} parent=1 // pred_region
      %s69 = ssub.s32 1280, 1280
      %70 = vsyncadd [#allocation9], %s69
      %s71 = sshll.u32 [#allocation10], 4
      %s72 = int_to_ptr.vmem [resolvable:$true] %s71
      %77 = dma.hbm_to_vmem [thread:$0]  %s6, 1280, %s72, [#allocation9], 256, 256, 16
    $region29: #{tpu_custom_call.1} parent=1 // pred_fallthru
      _
    // Predicated region
    $region30: #{tpu_custom_call.1} parent=1 // pred_check
      _
    $region31: #{tpu_custom_call.1} parent=1 // pred_check_branch
      %79 = sbr.rel (0) target = $region33
    $region32: #{tpu_custom_call.1} parent=1 // pred_region
      %80 = dma.done [#allocation3], 256
    $region33: #{tpu_custom_call.1} parent=1 // pred_fallthru
      _
    // Predicated region
    $region34: #{tpu_custom_call.1} parent=1 // pred_check
      _
    $region35: #{tpu_custom_call.1} parent=1 // pred_check_branch
      %82 = sbr.rel (0) target = $region37
    $region36: #{tpu_custom_call.1} parent=1 // pred_region
      %83 = dma.done [#allocation6], 2048
    $region37: #{tpu_custom_call.1} parent=1 // pred_fallthru
      _
    // Predicated region
    $region38: #{tpu_custom_call.1} parent=1 // pred_check
      _
    $region39: #{tpu_custom_call.1} parent=1 // pred_check_branch
      %85 = sbr.rel (0) target = $region41
    $region40: #{tpu_custom_call.1} parent=1 // pred_region
      %86 = dma.done [#allocation6], 2048
    $region41: #{tpu_custom_call.1} parent=1 // pred_fallthru
      _
    // Predicated region
    $region42: #{tpu_custom_call.1} parent=1 // pred_check
      _
    $region43: #{tpu_custom_call.1} parent=1 // pred_check_branch
      %88 = sbr.rel (0) target = $region45
    $region44: #{tpu_custom_call.1} parent=1 // pred_region
      %89 = dma.done [#allocation9], 640
    $region45: #{tpu_custom_call.1} parent=1 // pred_fallthru
      _
    // Predicated region
    $region46: #{tpu_custom_call.1} parent=1 // pred_check
      _
    $region47: #{tpu_custom_call.1} parent=1 // pred_check_branch
      %91 = sbr.rel (0) target = $region49
    $region48: #{tpu_custom_call.1} parent=1 // pred_region
      %92 = dma.done [#allocation9], 1280
    $region49: #{tpu_custom_call.1} parent=1 // pred_fallthru
      _
    %v94 = vld [vmem:[#allocation5] sm:$0xff]
    %v95 = vld [vmem:[#allocation5 + $0x8] sm:$0xff]
    %v96 = vld [vmem:[#allocation5 + $0x10] sm:$0xff]
    %v97 = vld [vmem:[#allocation5 + $0x18] sm:$0xff]
    %v98 = vld [vmem:[#allocation5 + $0x20] sm:$0xff]
    %v99 = vld [vmem:[#allocation5 + $0x28] sm:$0xff]
    %v100 = vld [vmem:[#allocation5 + $0x30] sm:$0xff]
    %v101 = vld [vmem:[#allocation5 + $0x38] sm:$0xff]
    %v102 = vld [vmem:[#allocation5 + $0x40] sm:$0xff]
    %v103 = vld [vmem:[#allocation5 + $0x48] sm:$0xff]
    %v104 = vld [vmem:[#allocation5 + $0x50] sm:$0xff]
    %v105 = vld [vmem:[#allocation5 + $0x58] sm:$0xff]
    %v106 = vld [vmem:[#allocation5 + $0x60] sm:$0xff]
    %v107 = vld [vmem:[#allocation5 + $0x68] sm:$0xff]
    %v108 = vld [vmem:[#allocation5 + $0x70] sm:$0xff]
    %v109 = vld [vmem:[#allocation5 + $0x78] sm:$0xff]
    %v110 = vld [vmem:[#allocation7] sm:$0xf]
    %v111 = vld [vmem:[#allocation7 + $0x4] sm:$0xf]
    %v112 = vld [vmem:[#allocation7 + $0x8] sm:$0xf]
    %v113 = vld [vmem:[#allocation7 + $0xc] sm:$0xf]
    %v114 = vld [vmem:[#allocation7 + $0x10] sm:$0xf]
    %v115 = vld [vmem:[#allocation7 + $0x14] sm:$0xf]
    %v116 = vld [vmem:[#allocation7 + $0x18] sm:$0xf]
    %v117 = vld [vmem:[#allocation7 + $0x1c] sm:$0xf]
    %v118 = vld [vmem:[#allocation7 + $0x20] sm:$0xf]
    %v119 = vld [vmem:[#allocation7 + $0x24] sm:$0xf]
    %v120 = vld [vmem:[#allocation7 + $0x28] sm:$0xf]
    %v121 = vld [vmem:[#allocation7 + $0x2c] sm:$0xf]
    %v122 = vld [vmem:[#allocation7 + $0x30] sm:$0xf]
    %v123 = vld [vmem:[#allocation7 + $0x34] sm:$0xf]
    %v124 = vld [vmem:[#allocation7 + $0x38] sm:$0xf]
    %v125 = vld [vmem:[#allocation7 + $0x3c] sm:$0xf]
    %v126 = vld [vmem:[#allocation7 + $0x40] sm:$0xf]
    %v127 = vld [vmem:[#allocation7 + $0x44] sm:$0xf]
    %v128 = vld [vmem:[#allocation7 + $0x48] sm:$0xf]
    %v129 = vld [vmem:[#allocation7 + $0x4c] sm:$0xf]
    %v130 = vld [vmem:[#allocation7 + $0x50] sm:$0xf]
    %v131 = vld [vmem:[#allocation7 + $0x54] sm:$0xf]
    %v132 = vld [vmem:[#allocation7 + $0x58] sm:$0xf]
    %v133 = vld [vmem:[#allocation7 + $0x5c] sm:$0xf]
    %v134 = vld [vmem:[#allocation7 + $0x60] sm:$0xf]
    %v135 = vld [vmem:[#allocation7 + $0x64] sm:$0xf]
    %v136 = vld [vmem:[#allocation7 + $0x68] sm:$0xf]
    %v137 = vld [vmem:[#allocation7 + $0x6c] sm:$0xf]
    %v138 = vld [vmem:[#allocation7 + $0x70] sm:$0xf]
    %v139 = vld [vmem:[#allocation7 + $0x74] sm:$0xf]
    %v140 = vld [vmem:[#allocation7 + $0x78] sm:$0xf]
    %v141 = vld [vmem:[#allocation7 + $0x7c] sm:$0xf]
    %v142 = vld [vmem:[%s3] sm:$0x3]
    %v143 = vld [vmem:[%s4] sm:$0x1]
    %v144 = vld [vmem:[#allocation2] sm:$0xff]
    %v145 = vld [vmem:[#allocation2 + $0x8] sm:$0xff]
    %v146 = vld [vmem:[#allocation8] sm:$0xff]
    %v147 = vpack.c.bf16 %v144, %v144
    %v148 = vpack.c.bf16 %v145, %v145
    %v150 = vlaneseq
    %v151 = vshrl.u32 %v150, 7
    %v152 = vsub.s32 0, %v151
    %v153 = vrot.slane %v143, %v152
    %v187 = vunpack.c.l.b16 %v110
    %v188 = vunpack.c.l.b16 %v111
    %v189 = vunpack.c.l.b16 %v112
    %v190 = vunpack.c.l.b16 %v113
    %v191 = vunpack.c.l.b16 %v114
    %v192 = vunpack.c.l.b16 %v115
    %v193 = vunpack.c.l.b16 %v116
    %v194 = vunpack.c.l.b16 %v117
    %v195 = vunpack.c.l.b16 %v118
    %v196 = vunpack.c.l.b16 %v119
    %v197 = vunpack.c.l.b16 %v120
    %v198 = vunpack.c.l.b16 %v121
    %v199 = vunpack.c.l.b16 %v122
    %v200 = vunpack.c.l.b16 %v123
    %v201 = vunpack.c.l.b16 %v124
    %v202 = vunpack.c.l.b16 %v125
    %v203 = vunpack.c.l.b16 %v126
    %v204 = vunpack.c.l.b16 %v127
    %v205 = vunpack.c.l.b16 %v128
    %v206 = vunpack.c.l.b16 %v129
    %v207 = vunpack.c.l.b16 %v130
    %v208 = vunpack.c.l.b16 %v131
    %v209 = vunpack.c.l.b16 %v132
    %v210 = vunpack.c.l.b16 %v133
    %v211 = vunpack.c.l.b16 %v134
    %v212 = vunpack.c.l.b16 %v135
    %v213 = vunpack.c.l.b16 %v136
    %v214 = vunpack.c.l.b16 %v137
    %v215 = vunpack.c.l.b16 %v138
    %v216 = vunpack.c.l.b16 %v139
    %v217 = vunpack.c.l.b16 %v140
    %v218 = vunpack.c.l.b16 %v141
    %v219 = vpack.c.b16 %v188, %v187
    %v220 = vpack.c.b16 %v190, %v189
    %v221 = vpack.c.b16 %v192, %v191
    %v222 = vpack.c.b16 %v194, %v193
    %v223 = vpack.c.b16 %v196, %v195
    %v224 = vpack.c.b16 %v198, %v197
    %v225 = vpack.c.b16 %v200, %v199
    %v226 = vpack.c.b16 %v202, %v201
    %v227 = vpack.c.b16 %v204, %v203
    %v228 = vpack.c.b16 %v206, %v205
    %v229 = vpack.c.b16 %v208, %v207
    %v230 = vpack.c.b16 %v210, %v209
    %v231 = vpack.c.b16 %v212, %v211
    %v232 = vpack.c.b16 %v214, %v213
    %v233 = vpack.c.b16 %v216, %v215
    %v234 = vpack.c.b16 %v218, %v217
    %251 = vmatprep.subr.bf16.mxu0 0
    %252 = vmatpush1.bf16.msra.mxu0 %v219
    %253 = vmatprep.subr.bf16.mxu0 0
    %254 = vmatpush1.bf16.msra.mxu0 %v220
    %255 = vmatprep.subr.bf16.mxu0 0
    %256 = vmatpush1.bf16.msra.mxu0 %v221
    %257 = vmatprep.subr.bf16.mxu0 0
    %258 = vmatpush1.bf16.msra.mxu0 %v222
    %259 = vmatprep.subr.bf16.mxu0 0
    %260 = vmatpush1.bf16.msra.mxu0 %v223
    %261 = vmatprep.subr.bf16.mxu0 0
    %262 = vmatpush1.bf16.msra.mxu0 %v224
    %263 = vmatprep.subr.bf16.mxu0 0
    %264 = vmatpush1.bf16.msra.mxu0 %v225
    %265 = vmatprep.subr.bf16.mxu0 0
    %266 = vmatpush1.bf16.msra.mxu0 %v226
    %267 = vmatprep.subr.bf16.mxu0 0
    %268 = vmatpush1.bf16.msra.mxu0 %v227
    %269 = vmatprep.subr.bf16.mxu0 0
    %270 = vmatpush1.bf16.msra.mxu0 %v228
    %271 = vmatprep.subr.bf16.mxu0 0
    %272 = vmatpush1.bf16.msra.mxu0 %v229
    %273 = vmatprep.subr.bf16.mxu0 0
    %274 = vmatpush1.bf16.msra.mxu0 %v230
    %275 = vmatprep.subr.bf16.mxu0 0
    %276 = vmatpush1.bf16.msra.mxu0 %v231
    %277 = vmatprep.subr.bf16.mxu0 0
    %278 = vmatpush1.bf16.msra.mxu0 %v232
    %279 = vmatprep.subr.bf16.mxu0 0
    %280 = vmatpush1.bf16.msra.mxu0 %v233
    %281 = vmatprep.subr.bf16.mxu0 0
    %282 = vmatpush1.bf16.msra.mxu0 %v234
    %283 = vmatprep.mubr.bf16.mxu0 %v148
    %284 = vmatmul.mubr.bf16.gmra.mrb[0].mxu0 %v147
    %v285 = vpop.f32.mrb[0].mxu0
    %v286 = vadd.f32 %v153, %v285
    %v287 = vpop.f32.mrb[0].mxu0
    %v288 = vpop.f32.mrb[0].mxu0
    %v289 = vpop.f32.mrb[0].mxu0
    %290 = vdwg.mxu0
    %v291 = vxor.u32 %v286, 2147483648
    %v292 = vmul.f32 %v291, 1.442695
    %v293 = vpow.pop %v292
    %v294 = vadd.f32 %v293, 1.0
    %v295 = vrcp.pop %v294
    %v296 = vmul.f32 1.0, %v295
    %vm297 = vcmp.gt.f32.partialorder %v296, %v146
    %v298 = vsel %vm297, 1.0, 0.0
    %v299 = vld [vmem:[#allocation10] sm:$0xff]
    %v300 = vld [vmem:[#allocation10 + $0x8] sm:$0xff]
    %v301 = vpack.c.bf16 %v298, %v298
    %v303 = vlaneseq
    %v304 = vshrl.u32 %v303, 7
    %v305 = vsub.s32 0, %v304
    %v306 = vrot.slane %v142, %v305
    %v307 = vlaneseq
    %v308 = vshrl.u32 %v307, 7
    %v309 = vsub.s32 1, %v308
    %v310 = vrot.slane %v142, %v309
    %v329 = vunpack.c.l.b16 %v94
    %v330 = vunpack.c.h.b16 %v94
    %v331 = vunpack.c.l.b16 %v95
    %v332 = vunpack.c.h.b16 %v95
    %v333 = vunpack.c.l.b16 %v96
    %v334 = vunpack.c.h.b16 %v96
    %v335 = vunpack.c.l.b16 %v97
    %v336 = vunpack.c.h.b16 %v97
    %v337 = vunpack.c.l.b16 %v98
    %v338 = vunpack.c.h.b16 %v98
    %v339 = vunpack.c.l.b16 %v99
    %v340 = vunpack.c.h.b16 %v99
    %v341 = vunpack.c.l.b16 %v100
    %v342 = vunpack.c.h.b16 %v100
    %v343 = vunpack.c.l.b16 %v101
    %v344 = vunpack.c.h.b16 %v101
    %v345 = vunpack.c.l.b16 %v102
    %v346 = vunpack.c.h.b16 %v102
    %v347 = vunpack.c.l.b16 %v103
    %v348 = vunpack.c.h.b16 %v103
    %v349 = vunpack.c.l.b16 %v104
    %v350 = vunpack.c.h.b16 %v104
    %v351 = vunpack.c.l.b16 %v105
    %v352 = vunpack.c.h.b16 %v105
    %v353 = vunpack.c.l.b16 %v106
    %v354 = vunpack.c.h.b16 %v106
    %v355 = vunpack.c.l.b16 %v107
    %v356 = vunpack.c.h.b16 %v107
    %v357 = vunpack.c.l.b16 %v108
    %v358 = vunpack.c.h.b16 %v108
    %v359 = vunpack.c.l.b16 %v109
    %v360 = vunpack.c.h.b16 %v109
    %v361 = vpack.c.b16 %v331, %v329
    %v362 = vpack.c.b16 %v332, %v330
    %v363 = vpack.c.b16 %v335, %v333
    %v364 = vpack.c.b16 %v336, %v334
    %v365 = vpack.c.b16 %v339, %v337
    %v366 = vpack.c.b16 %v340, %v338
    %v367 = vpack.c.b16 %v343, %v341
    %v368 = vpack.c.b16 %v344, %v342
    %v369 = vpack.c.b16 %v347, %v345
    %v370 = vpack.c.b16 %v348, %v346
    %v371 = vpack.c.b16 %v351, %v349
    %v372 = vpack.c.b16 %v352, %v350
    %v373 = vpack.c.b16 %v355, %v353
    %v374 = vpack.c.b16 %v356, %v354
    %v375 = vpack.c.b16 %v359, %v357
    %v376 = vpack.c.b16 %v360, %v358
    %393 = vmatprep.subr.bf16.mxu0 %v362
    %394 = vmatpush1.bf16.msra.mxu0 %v361
    %395 = vmatprep.subr.bf16.mxu0 %v364
    %396 = vmatpush1.bf16.msra.mxu0 %v363
    %397 = vmatprep.subr.bf16.mxu0 %v366
    %398 = vmatpush1.bf16.msra.mxu0 %v365
    %399 = vmatprep.subr.bf16.mxu0 %v368
    %400 = vmatpush1.bf16.msra.mxu0 %v367
    %401 = vmatprep.subr.bf16.mxu0 %v370
    %402 = vmatpush1.bf16.msra.mxu0 %v369
    %403 = vmatprep.subr.bf16.mxu0 %v372
    %404 = vmatpush1.bf16.msra.mxu0 %v371
    %405 = vmatprep.subr.bf16.mxu0 %v374
    %406 = vmatpush1.bf16.msra.mxu0 %v373
    %407 = vmatprep.subr.bf16.mxu0 %v376
    %408 = vmatpush1.bf16.msra.mxu0 %v375
    %409 = vmatprep.subr.bf16.mxu0 0
    %410 = vmatpush1.bf16.msra.mxu0 0
    %411 = vmatprep.subr.bf16.mxu0 0
    %412 = vmatpush1.bf16.msra.mxu0 0
    %413 = vmatprep.subr.bf16.mxu0 0
    %414 = vmatpush1.bf16.msra.mxu0 0
    %415 = vmatprep.subr.bf16.mxu0 0
    %416 = vmatpush1.bf16.msra.mxu0 0
    %417 = vmatprep.subr.bf16.mxu0 0
    %418 = vmatpush1.bf16.msra.mxu0 0
    %419 = vmatprep.subr.bf16.mxu0 0
    %420 = vmatpush1.bf16.msra.mxu0 0
    %421 = vmatprep.subr.bf16.mxu0 0
    %422 = vmatpush1.bf16.msra.mxu0 0
    %423 = vmatprep.subr.bf16.mxu0 0
    %424 = vmatpush1.bf16.msra.mxu0 0
    %425 = vmatprep.mubr.bf16.mxu0 0
    %426 = vmatmul.mubr.bf16.gmra.mrb[0].mxu0 %v301
    %v427 = vpop.f32.mrb[0].mxu0
    %v428 = vadd.f32 %v306, %v427
    %v429 = vpop.f32.mrb[0].mxu0
    %v430 = vadd.f32 %v310, %v429
    %v431 = vpop.f32.mrb[0].mxu0
    %v432 = vpop.f32.mrb[0].mxu0
    %433 = vdwg.mxu0
    %v434 = vxor.u32 %v428, 2147483648
    %v435 = vxor.u32 %v430, 2147483648
    %v436 = vmul.f32 %v434, 1.442695
    %v437 = vpow.pop %v436
    %v438 = vmul.f32 %v435, 1.442695
    %v439 = vpow.pop %v438
    %v440 = vadd.f32 %v437, 1.0
    %v441 = vadd.f32 %v439, 1.0
    %v442 = vrcp.pop %v440
    %v443 = vmul.f32 1.0, %v442
    %v444 = vrcp.pop %v441
    %v445 = vmul.f32 1.0, %v444
    %vm446 = vcmp.gt.f32.partialorder %v443, %v299
    %vm447 = vcmp.gt.f32.partialorder %v445, %v300
    %v448 = vsel %vm446, 1.0, 0.0
    %v449 = vsel %vm447, 1.0, 0.0
    %s450 = scalar_lea.vmem [#allocation8], 8
    %v451 = vld [vmem:[%s450] sm:$0xff]
    %v452 = vpack.c.bf16 %v448, %v448
    %v453 = vpack.c.bf16 %v449, %v449
    %454 = vmatprep.subr.bf16.mxu0 0
    %455 = vmatpush1.bf16.msra.mxu0 %v219
    %456 = vmatprep.subr.bf16.mxu0 0
    %457 = vmatpush1.bf16.msra.mxu0 %v220
    %458 = vmatprep.subr.bf16.mxu0 0
    %459 = vmatpush1.bf16.msra.mxu0 %v221
    %460 = vmatprep.subr.bf16.mxu0 0
    %461 = vmatpush1.bf16.msra.mxu0 %v222
    %462 = vmatprep.subr.bf16.mxu0 0
    %463 = vmatpush1.bf16.msra.mxu0 %v223
    %464 = vmatprep.subr.bf16.mxu0 0
    %465 = vmatpush1.bf16.msra.mxu0 %v224
    %466 = vmatprep.subr.bf16.mxu0 0
    %467 = vmatpush1.bf16.msra.mxu0 %v225
    %468 = vmatprep.subr.bf16.mxu0 0
    %469 = vmatpush1.bf16.msra.mxu0 %v226
    %470 = vmatprep.subr.bf16.mxu0 0
    %471 = vmatpush1.bf16.msra.mxu0 %v227
    %472 = vmatprep.subr.bf16.mxu0 0
    %473 = vmatpush1.bf16.msra.mxu0 %v228
    %474 = vmatprep.subr.bf16.mxu0 0
    %475 = vmatpush1.bf16.msra.mxu0 %v229
    %476 = vmatprep.subr.bf16.mxu0 0
    %477 = vmatpush1.bf16.msra.mxu0 %v230
    %478 = vmatprep.subr.bf16.mxu0 0
    %479 = vmatpush1.bf16.msra.mxu0 %v231
    %480 = vmatprep.subr.bf16.mxu0 0
    %481 = vmatpush1.bf16.msra.mxu0 %v232
    %482 = vmatprep.subr.bf16.mxu0 0
    %483 = vmatpush1.bf16.msra.mxu0 %v233
    %484 = vmatprep.subr.bf16.mxu0 0
    %485 = vmatpush1.bf16.msra.mxu0 %v234
    %486 = vmatprep.mubr.bf16.mxu0 %v453
    %487 = vmatmul.mubr.bf16.gmra.mrb[0].mxu0 %v452
    %v488 = vpop.f32.mrb[0].mxu0
    %v489 = vadd.f32 %v153, %v488
    %v490 = vpop.f32.mrb[0].mxu0
    %v491 = vpop.f32.mrb[0].mxu0
    %v492 = vpop.f32.mrb[0].mxu0
    %493 = vdwg.mxu0
    %v494 = vxor.u32 %v489, 2147483648
    %v495 = vmul.f32 %v494, 1.442695
    %v496 = vpow.pop %v495
    %v497 = vadd.f32 %v496, 1.0
    %v498 = vrcp.pop %v497
    %v499 = vmul.f32 1.0, %v498
    %vm500 = vcmp.gt.f32.partialorder %v499, %v451
    %v501 = vsel %vm500, 1.0, 0.0
    %s502 = scalar_lea.vmem [#allocation10], 16
    %v503 = vld [vmem:[%s502] sm:$0xff]
    %v504 = vld [vmem:[%s502 + $0x8] sm:$0xff]
    %v505 = vpack.c.bf16 %v501, %v501
    %506 = vmatprep.subr.bf16.mxu0 %v362
    %507 = vmatpush1.bf16.msra.mxu0 %v361
    %508 = vmatprep.subr.bf16.mxu0 %v364
    %509 = vmatpush1.bf16.msra.mxu0 %v363
    %510 = vmatprep.subr.bf16.mxu0 %v366
    %511 = vmatpush1.bf16.msra.mxu0 %v365
    %512 = vmatprep.subr.bf16.mxu0 %v368
    %513 = vmatpush1.bf16.msra.mxu0 %v367
    %514 = vmatprep.subr.bf16.mxu0 %v370
    %515 = vmatpush1.bf16.msra.mxu0 %v369
    %516 = vmatprep.subr.bf16.mxu0 %v372
    %517 = vmatpush1.bf16.msra.mxu0 %v371
    %518 = vmatprep.subr.bf16.mxu0 %v374
    %519 = vmatpush1.bf16.msra.mxu0 %v373
    %520 = vmatprep.subr.bf16.mxu0 %v376
    %521 = vmatpush1.bf16.msra.mxu0 %v375
    %522 = vmatprep.subr.bf16.mxu0 0
    %523 = vmatpush1.bf16.msra.mxu0 0
    %524 = vmatprep.subr.bf16.mxu0 0
    %525 = vmatpush1.bf16.msra.mxu0 0
    %526 = vmatprep.subr.bf16.mxu0 0
    %527 = vmatpush1.bf16.msra.mxu0 0
    %528 = vmatprep.subr.bf16.mxu0 0
    %529 = vmatpush1.bf16.msra.mxu0 0
    %530 = vmatprep.subr.bf16.mxu0 0
    %531 = vmatpush1.bf16.msra.mxu0 0
    %532 = vmatprep.subr.bf16.mxu0 0
    %533 = vmatpush1.bf16.msra.mxu0 0
    %534 = vmatprep.subr.bf16.mxu0 0
    %535 = vmatpush1.bf16.msra.mxu0 0
    %536 = vmatprep.subr.bf16.mxu0 0
    %537 = vmatpush1.bf16.msra.mxu0 0
    %538 = vmatprep.mubr.bf16.mxu0 0
    %539 = vmatmul.mubr.bf16.gmra.mrb[0].mxu0 %v505
    %v540 = vpop.f32.mrb[0].mxu0
    %v541 = vadd.f32 %v306, %v540
    %v542 = vpop.f32.mrb[0].mxu0
    %v543 = vadd.f32 %v310, %v542
    %v544 = vpop.f32.mrb[0].mxu0
    %v545 = vpop.f32.mrb[0].mxu0
    %546 = vdwg.mxu0
    %v547 = vxor.u32 %v541, 2147483648
    %v548 = vxor.u32 %v543, 2147483648
    %v549 = vmul.f32 %v547, 1.442695
    %v550 = vpow.pop %v549
    %v551 = vmul.f32 %v548, 1.442695
    %v552 = vpow.pop %v551
    %v553 = vadd.f32 %v550, 1.0
    %v554 = vadd.f32 %v552, 1.0
    %v555 = vrcp.pop %v553
    %v556 = vmul.f32 1.0, %v555
    %v557 = vrcp.pop %v554
    %v558 = vmul.f32 1.0, %v557
    %vm559 = vcmp.gt.f32.partialorder %v556, %v503
    %vm560 = vcmp.gt.f32.partialorder %v558, %v504
    %v561 = vsel %vm559, 1.0, 0.0
    %v562 = vsel %vm560, 1.0, 0.0
    %s563 = scalar_lea.vmem [#allocation8], 16
    %v564 = vld [vmem:[%s563] sm:$0xff]
    %v565 = vpack.c.bf16 %v561, %v561
    %v566 = vpack.c.bf16 %v562, %v562
    %567 = vmatprep.subr.bf16.mxu0 0
    %568 = vmatpush1.bf16.msra.mxu0 %v219
    %569 = vmatprep.subr.bf16.mxu0 0
    %570 = vmatpush1.bf16.msra.mxu0 %v220
    %571 = vmatprep.subr.bf16.mxu0 0
    %572 = vmatpush1.bf16.msra.mxu0 %v221
    %573 = vmatprep.subr.bf16.mxu0 0
    %574 = vmatpush1.bf16.msra.mxu0 %v222
    %575 = vmatprep.subr.bf16.mxu0 0
    %576 = vmatpush1.bf16.msra.mxu0 %v223
    %577 = vmatprep.subr.bf16.mxu0 0
    %578 = vmatpush1.bf16.msra.mxu0 %v224
    %579 = vmatprep.subr.bf16.mxu0 0
    %580 = vmatpush1.bf16.msra.mxu0 %v225
    %581 = vmatprep.subr.bf16.mxu0 0
    %582 = vmatpush1.bf16.msra.mxu0 %v226
    %583 = vmatprep.subr.bf16.mxu0 0
    %584 = vmatpush1.bf16.msra.mxu0 %v227
    %585 = vmatprep.subr.bf16.mxu0 0
    %586 = vmatpush1.bf16.msra.mxu0 %v228
    %587 = vmatprep.subr.bf16.mxu0 0
    %588 = vmatpush1.bf16.msra.mxu0 %v229
    %589 = vmatprep.subr.bf16.mxu0 0
    %590 = vmatpush1.bf16.msra.mxu0 %v230
    %591 = vmatprep.subr.bf16.mxu0 0
    %592 = vmatpush1.bf16.msra.mxu0 %v231
    %593 = vmatprep.subr.bf16.mxu0 0
    %594 = vmatpush1.bf16.msra.mxu0 %v232
    %595 = vmatprep.subr.bf16.mxu0 0
    %596 = vmatpush1.bf16.msra.mxu0 %v233
    %597 = vmatprep.subr.bf16.mxu0 0
    %598 = vmatpush1.bf16.msra.mxu0 %v234
    %599 = vmatprep.mubr.bf16.mxu0 %v566
    %600 = vmatmul.mubr.bf16.gmra.mrb[0].mxu0 %v565
    %v601 = vpop.f32.mrb[0].mxu0
    %v602 = vadd.f32 %v153, %v601
    %v603 = vpop.f32.mrb[0].mxu0
    %v604 = vpop.f32.mrb[0].mxu0
    %v605 = vpop.f32.mrb[0].mxu0
    %606 = vdwg.mxu0
    %v607 = vxor.u32 %v602, 2147483648
    %v608 = vmul.f32 %v607, 1.442695
    %v609 = vpow.pop %v608
    %v610 = vadd.f32 %v609, 1.0
    %v611 = vrcp.pop %v610
    %v612 = vmul.f32 1.0, %v611
    %vm613 = vcmp.gt.f32.partialorder %v612, %v564
    %v614 = vsel %vm613, 1.0, 0.0
    %s615 = scalar_lea.vmem [#allocation10], 32
    %v616 = vld [vmem:[%s615] sm:$0xff]
    %v617 = vld [vmem:[%s615 + $0x8] sm:$0xff]
    %v618 = vpack.c.bf16 %v614, %v614
    %619 = vmatprep.subr.bf16.mxu0 %v362
    %620 = vmatpush1.bf16.msra.mxu0 %v361
    %621 = vmatprep.subr.bf16.mxu0 %v364
    %622 = vmatpush1.bf16.msra.mxu0 %v363
    %623 = vmatprep.subr.bf16.mxu0 %v366
    %624 = vmatpush1.bf16.msra.mxu0 %v365
    %625 = vmatprep.subr.bf16.mxu0 %v368
    %626 = vmatpush1.bf16.msra.mxu0 %v367
    %627 = vmatprep.subr.bf16.mxu0 %v370
    %628 = vmatpush1.bf16.msra.mxu0 %v369
    %629 = vmatprep.subr.bf16.mxu0 %v372
    %630 = vmatpush1.bf16.msra.mxu0 %v371
    %631 = vmatprep.subr.bf16.mxu0 %v374
    %632 = vmatpush1.bf16.msra.mxu0 %v373
    %633 = vmatprep.subr.bf16.mxu0 %v376
    %634 = vmatpush1.bf16.msra.mxu0 %v375
    %635 = vmatprep.subr.bf16.mxu0 0
    %636 = vmatpush1.bf16.msra.mxu0 0
    %637 = vmatprep.subr.bf16.mxu0 0
    %638 = vmatpush1.bf16.msra.mxu0 0
    %639 = vmatprep.subr.bf16.mxu0 0
    %640 = vmatpush1.bf16.msra.mxu0 0
    %641 = vmatprep.subr.bf16.mxu0 0
    %642 = vmatpush1.bf16.msra.mxu0 0
    %643 = vmatprep.subr.bf16.mxu0 0
    %644 = vmatpush1.bf16.msra.mxu0 0
    %645 = vmatprep.subr.bf16.mxu0 0
    %646 = vmatpush1.bf16.msra.mxu0 0
    %647 = vmatprep.subr.bf16.mxu0 0
    %648 = vmatpush1.bf16.msra.mxu0 0
    %649 = vmatprep.subr.bf16.mxu0 0
    %650 = vmatpush1.bf16.msra.mxu0 0
    %651 = vmatprep.mubr.bf16.mxu0 0
    %652 = vmatmul.mubr.bf16.gmra.mrb[0].mxu0 %v618
    %v653 = vpop.f32.mrb[0].mxu0
    %v654 = vadd.f32 %v306, %v653
    %v655 = vpop.f32.mrb[0].mxu0
    %v656 = vadd.f32 %v310, %v655
    %v657 = vpop.f32.mrb[0].mxu0
    %v658 = vpop.f32.mrb[0].mxu0
    %659 = vdwg.mxu0
    %v660 = vxor.u32 %v654, 2147483648
    %v661 = vxor.u32 %v656, 2147483648
    %v662 = vmul.f32 %v660, 1.442695
    %v663 = vpow.pop %v662
    %v664 = vmul.f32 %v661, 1.442695
    %v665 = vpow.pop %v664
    %v666 = vadd.f32 %v663, 1.0
    %v667 = vadd.f32 %v665, 1.0
    %v668 = vrcp.pop %v666
    %v669 = vmul.f32 1.0, %v668
    %v670 = vrcp.pop %v667
    %v671 = vmul.f32 1.0, %v670
    %vm672 = vcmp.gt.f32.partialorder %v669, %v616
    %vm673 = vcmp.gt.f32.partialorder %v671, %v617
    %v674 = vsel %vm672, 1.0, 0.0
    %v675 = vsel %vm673, 1.0, 0.0
    %s676 = scalar_lea.vmem [#allocation8], 24
    %v677 = vld [vmem:[%s676] sm:$0xff]
    %v678 = vpack.c.bf16 %v674, %v674
    %v679 = vpack.c.bf16 %v675, %v675
    %680 = vmatprep.subr.bf16.mxu0 0
    %681 = vmatpush1.bf16.msra.mxu0 %v219
    %682 = vmatprep.subr.bf16.mxu0 0
    %683 = vmatpush1.bf16.msra.mxu0 %v220
    %684 = vmatprep.subr.bf16.mxu0 0
    %685 = vmatpush1.bf16.msra.mxu0 %v221
    %686 = vmatprep.subr.bf16.mxu0 0
    %687 = vmatpush1.bf16.msra.mxu0 %v222
    %688 = vmatprep.subr.bf16.mxu0 0
    %689 = vmatpush1.bf16.msra.mxu0 %v223
    %690 = vmatprep.subr.bf16.mxu0 0
    %691 = vmatpush1.bf16.msra.mxu0 %v224
    %692 = vmatprep.subr.bf16.mxu0 0
    %693 = vmatpush1.bf16.msra.mxu0 %v225
    %694 = vmatprep.subr.bf16.mxu0 0
    %695 = vmatpush1.bf16.msra.mxu0 %v226
    %696 = vmatprep.subr.bf16.mxu0 0
    %697 = vmatpush1.bf16.msra.mxu0 %v227
    %698 = vmatprep.subr.bf16.mxu0 0
    %699 = vmatpush1.bf16.msra.mxu0 %v228
    %700 = vmatprep.subr.bf16.mxu0 0
    %701 = vmatpush1.bf16.msra.mxu0 %v229
    %702 = vmatprep.subr.bf16.mxu0 0
    %703 = vmatpush1.bf16.msra.mxu0 %v230
    %704 = vmatprep.subr.bf16.mxu0 0
    %705 = vmatpush1.bf16.msra.mxu0 %v231
    %706 = vmatprep.subr.bf16.mxu0 0
    %707 = vmatpush1.bf16.msra.mxu0 %v232
    %708 = vmatprep.subr.bf16.mxu0 0
    %709 = vmatpush1.bf16.msra.mxu0 %v233
    %710 = vmatprep.subr.bf16.mxu0 0
    %711 = vmatpush1.bf16.msra.mxu0 %v234
    %712 = vmatprep.mubr.bf16.mxu0 %v679
    %713 = vmatmul.mubr.bf16.gmra.mrb[0].mxu0 %v678
    %v714 = vpop.f32.mrb[0].mxu0
    %v715 = vadd.f32 %v153, %v714
    %v716 = vpop.f32.mrb[0].mxu0
    %v717 = vpop.f32.mrb[0].mxu0
    %v718 = vpop.f32.mrb[0].mxu0
    %719 = vdwg.mxu0
    %v720 = vxor.u32 %v715, 2147483648
    %v721 = vmul.f32 %v720, 1.442695
    %v722 = vpow.pop %v721
    %v723 = vadd.f32 %v722, 1.0
    %v724 = vrcp.pop %v723
    %v725 = vmul.f32 1.0, %v724
    %vm726 = vcmp.gt.f32.partialorder %v725, %v677
    %v727 = vsel %vm726, 1.0, 0.0
    %s728 = scalar_lea.vmem [#allocation10], 48
    %v729 = vld [vmem:[%s728] sm:$0xff]
    %v730 = vld [vmem:[%s728 + $0x8] sm:$0xff]
    %v731 = vpack.c.bf16 %v727, %v727
    %732 = vmatprep.subr.bf16.mxu0 %v362
    %733 = vmatpush1.bf16.msra.mxu0 %v361
    %734 = vmatprep.subr.bf16.mxu0 %v364
    %735 = vmatpush1.bf16.msra.mxu0 %v363
    %736 = vmatprep.subr.bf16.mxu0 %v366
    %737 = vmatpush1.bf16.msra.mxu0 %v365
    %738 = vmatprep.subr.bf16.mxu0 %v368
    %739 = vmatpush1.bf16.msra.mxu0 %v367
    %740 = vmatprep.subr.bf16.mxu0 %v370
    %741 = vmatpush1.bf16.msra.mxu0 %v369
    %742 = vmatprep.subr.bf16.mxu0 %v372
    %743 = vmatpush1.bf16.msra.mxu0 %v371
    %744 = vmatprep.subr.bf16.mxu0 %v374
    %745 = vmatpush1.bf16.msra.mxu0 %v373
    %746 = vmatprep.subr.bf16.mxu0 %v376
    %747 = vmatpush1.bf16.msra.mxu0 %v375
    %748 = vmatprep.subr.bf16.mxu0 0
    %749 = vmatpush1.bf16.msra.mxu0 0
    %750 = vmatprep.subr.bf16.mxu0 0
    %751 = vmatpush1.bf16.msra.mxu0 0
    %752 = vmatprep.subr.bf16.mxu0 0
    %753 = vmatpush1.bf16.msra.mxu0 0
    %754 = vmatprep.subr.bf16.mxu0 0
    %755 = vmatpush1.bf16.msra.mxu0 0
    %756 = vmatprep.subr.bf16.mxu0 0
    %757 = vmatpush1.bf16.msra.mxu0 0
    %758 = vmatprep.subr.bf16.mxu0 0
    %759 = vmatpush1.bf16.msra.mxu0 0
    %760 = vmatprep.subr.bf16.mxu0 0
    %761 = vmatpush1.bf16.msra.mxu0 0
    %762 = vmatprep.subr.bf16.mxu0 0
    %763 = vmatpush1.bf16.msra.mxu0 0
    %764 = vmatprep.mubr.bf16.mxu0 0
    %765 = vmatmul.mubr.bf16.gmra.mrb[0].mxu0 %v731
    %v766 = vpop.f32.mrb[0].mxu0
    %v767 = vadd.f32 %v306, %v766
    %v768 = vpop.f32.mrb[0].mxu0
    %v769 = vadd.f32 %v310, %v768
    %v770 = vpop.f32.mrb[0].mxu0
    %v771 = vpop.f32.mrb[0].mxu0
    %772 = vdwg.mxu0
    %v773 = vxor.u32 %v767, 2147483648
    %v774 = vxor.u32 %v769, 2147483648
    %v775 = vmul.f32 %v773, 1.442695
    %v776 = vpow.pop %v775
    %v777 = vmul.f32 %v774, 1.442695
    %v778 = vpow.pop %v777
    %v779 = vadd.f32 %v776, 1.0
    %v780 = vadd.f32 %v778, 1.0
    %v781 = vrcp.pop %v779
    %v782 = vmul.f32 1.0, %v781
    %v783 = vrcp.pop %v780
    %v784 = vmul.f32 1.0, %v783
    %vm785 = vcmp.gt.f32.partialorder %v782, %v729
    %vm786 = vcmp.gt.f32.partialorder %v784, %v730
    %v787 = vsel %vm785, 1.0, 0.0
    %v788 = vsel %vm786, 1.0, 0.0
    %s789 = scalar_lea.vmem [#allocation8], 32
    %v790 = vld [vmem:[%s789] sm:$0xff]
    %v791 = vpack.c.bf16 %v787, %v787
    %v792 = vpack.c.bf16 %v788, %v788
    %793 = vmatprep.subr.bf16.mxu0 0
    %794 = vmatpush1.bf16.msra.mxu0 %v219
    %795 = vmatprep.subr.bf16.mxu0 0
    %796 = vmatpush1.bf16.msra.mxu0 %v220
    %797 = vmatprep.subr.bf16.mxu0 0
    %798 = vmatpush1.bf16.msra.mxu0 %v221
    %799 = vmatprep.subr.bf16.mxu0 0
    %800 = vmatpush1.bf16.msra.mxu0 %v222
    %801 = vmatprep.subr.bf16.mxu0 0
    %802 = vmatpush1.bf16.msra.mxu0 %v223
    %803 = vmatprep.subr.bf16.mxu0 0
    %804 = vmatpush1.bf16.msra.mxu0 %v224
    %805 = vmatprep.subr.bf16.mxu0 0
    %806 = vmatpush1.bf16.msra.mxu0 %v225
    %807 = vmatprep.subr.bf16.mxu0 0
    %808 = vmatpush1.bf16.msra.mxu0 %v226
    %809 = vmatprep.subr.bf16.mxu0 0
    %810 = vmatpush1.bf16.msra.mxu0 %v227
    %811 = vmatprep.subr.bf16.mxu0 0
    %812 = vmatpush1.bf16.msra.mxu0 %v228
    %813 = vmatprep.subr.bf16.mxu0 0
    %814 = vmatpush1.bf16.msra.mxu0 %v229
    %815 = vmatprep.subr.bf16.mxu0 0
    %816 = vmatpush1.bf16.msra.mxu0 %v230
    %817 = vmatprep.subr.bf16.mxu0 0
    %818 = vmatpush1.bf16.msra.mxu0 %v231
    %819 = vmatprep.subr.bf16.mxu0 0
    %820 = vmatpush1.bf16.msra.mxu0 %v232
    %821 = vmatprep.subr.bf16.mxu0 0
    %822 = vmatpush1.bf16.msra.mxu0 %v233
    %823 = vmatprep.subr.bf16.mxu0 0
    %824 = vmatpush1.bf16.msra.mxu0 %v234
    %825 = vmatprep.mubr.bf16.mxu0 %v792
    %826 = vmatmul.mubr.bf16.gmra.mrb[0].mxu0 %v791
    %v827 = vpop.f32.mrb[0].mxu0
    %v828 = vadd.f32 %v153, %v827
    %v829 = vpop.f32.mrb[0].mxu0
    %v830 = vpop.f32.mrb[0].mxu0
    %v831 = vpop.f32.mrb[0].mxu0
    %832 = vdwg.mxu0
    %v833 = vxor.u32 %v828, 2147483648
    %v834 = vmul.f32 %v833, 1.442695
    %v835 = vpow.pop %v834
    %v836 = vadd.f32 %v835, 1.0
    %v837 = vrcp.pop %v836
    %v838 = vmul.f32 1.0, %v837
    %vm839 = vcmp.gt.f32.partialorder %v838, %v790
    %v840 = vsel %vm839, 1.0, 0.0
    %s841 = scalar_lea.vmem [#allocation10], 64
    %v842 = vld [vmem:[%s841] sm:$0xff]
    %v843 = vld [vmem:[%s841 + $0x8] sm:$0xff]
    %v844 = vpack.c.bf16 %v840, %v840
    %845 = vmatprep.subr.bf16.mxu0 %v362
    %846 = vmatpush1.bf16.msra.mxu0 %v361
    %847 = vmatprep.subr.bf16.mxu0 %v364
    %848 = vmatpush1.bf16.msra.mxu0 %v363
    %849 = vmatprep.subr.bf16.mxu0 %v366
    %850 = vmatpush1.bf16.msra.mxu0 %v365
    %851 = vmatprep.subr.bf16.mxu0 %v368
    %852 = vmatpush1.bf16.msra.mxu0 %v367
    %853 = vmatprep.subr.bf16.mxu0 %v370
    %854 = vmatpush1.bf16.msra.mxu0 %v369
    %855 = vmatprep.subr.bf16.mxu0 %v372
    %856 = vmatpush1.bf16.msra.mxu0 %v371
    %857 = vmatprep.subr.bf16.mxu0 %v374
    %858 = vmatpush1.bf16.msra.mxu0 %v373
    %859 = vmatprep.subr.bf16.mxu0 %v376
    %860 = vmatpush1.bf16.msra.mxu0 %v375
    %861 = vmatprep.subr.bf16.mxu0 0
    %862 = vmatpush1.bf16.msra.mxu0 0
    %863 = vmatprep.subr.bf16.mxu0 0
    %864 = vmatpush1.bf16.msra.mxu0 0
    %865 = vmatprep.subr.bf16.mxu0 0
    %866 = vmatpush1.bf16.msra.mxu0 0
    %867 = vmatprep.subr.bf16.mxu0 0
    %868 = vmatpush1.bf16.msra.mxu0 0
    %869 = vmatprep.subr.bf16.mxu0 0
    %870 = vmatpush1.bf16.msra.mxu0 0
    %871 = vmatprep.subr.bf16.mxu0 0
    %872 = vmatpush1.bf16.msra.mxu0 0
    %873 = vmatprep.subr.bf16.mxu0 0
    %874 = vmatpush1.bf16.msra.mxu0 0
    %875 = vmatprep.subr.bf16.mxu0 0
    %876 = vmatpush1.bf16.msra.mxu0 0
    %877 = vmatprep.mubr.bf16.mxu0 0
    %878 = vmatmul.mubr.bf16.gmra.mrb[0].mxu0 %v844
    %v879 = vpop.f32.mrb[0].mxu0
    %v880 = vadd.f32 %v306, %v879
    %v881 = vpop.f32.mrb[0].mxu0
    %v882 = vadd.f32 %v310, %v881
    %v883 = vpop.f32.mrb[0].mxu0
    %v884 = vpop.f32.mrb[0].mxu0
    %885 = vdwg.mxu0
    %v886 = vxor.u32 %v880, 2147483648
    %v887 = vxor.u32 %v882, 2147483648
    %v888 = vmul.f32 %v886, 1.442695
    %v889 = vpow.pop %v888
    %v890 = vmul.f32 %v887, 1.442695
    %v891 = vpow.pop %v890
    %v892 = vadd.f32 %v889, 1.0
    %v893 = vadd.f32 %v891, 1.0
    %v894 = vrcp.pop %v892
    %v895 = vmul.f32 1.0, %v894
    %v896 = vrcp.pop %v893
    %v897 = vmul.f32 1.0, %v896
    %vm898 = vcmp.gt.f32.partialorder %v895, %v842
    %vm899 = vcmp.gt.f32.partialorder %v897, %v843
    %v900 = vsel %vm898, 1.0, 0.0
    %v901 = vsel %vm899, 1.0, 0.0
    %902 = vst [vmem:[#allocation11] sm:$0xff] %v900
    %903 = vst [vmem:[#allocation11 + $0x8] sm:$0xff] %v901
    // Predicated region
    $region50: #{tpu_custom_call.1} parent=1 // pred_check
      _
    $region51: #{tpu_custom_call.1} parent=1 // pred_check_branch
      %905 = sbr.rel (0) target = $region53
    $region52: #{tpu_custom_call.1} parent=1 // pred_region
      %s907 = ssub.s32 256, 256
      %908 = vsyncadd [#allocation4], %s907
      %s910 = sshll.u32 [#allocation11], 4
      %s911 = int_to_ptr.vmem [resolvable:$true] %s910
      %913 = dma.vmem_to_hbm [thread:$0]  %s911, 256, %s7, [#allocation4]
    $region53: #{tpu_custom_call.1} parent=1 // pred_fallthru
      _
    // Predicated region
    $region54: #{tpu_custom_call.1} parent=1 // pred_check
      _
    $region55: #{tpu_custom_call.1} parent=1 // pred_check_branch
      %915 = sbr.rel (0) target = $region57
    $region56: #{tpu_custom_call.1} parent=1 // pred_region
      %916 = dma.done [#allocation4], 256
    $region57: #{tpu_custom_call.1} parent=1 // pred_fallthru
      _
    %917 = vsyncpa [#allocation3], 1
    %918 = vsyncpa [#allocation6], 1
    %919 = vsyncpa [#allocation9], 1
    %920 = vsyncpa [#allocation4], 1

</llo_original>
